<compile_context>
chip_gen: v7x
topology: tpu7x:2x2x1
jax: 0.10.0
libtpu: 0.0.40
codegen_flags: <defaults>
</compile_context>

<pallas_src>
import jax
import jax.numpy as jnp
from jax import lax
from jax.experimental import pallas as pl
from jax.experimental.pallas import tpu as pltpu


def _kernel_nt(x_ref, emb_ref, o_ref):
    # x_ref  : (TM, D)   current T tile of the current batch element
    # emb_ref: (N, D)    speaker embeddings
    # o_ref  : (N, TM)   lane-dense output tile (T on the lane axis)
    o_ref[...] = lax.dot_general(
        emb_ref[...], x_ref[...],
        dimension_numbers=(((1,), (1,)), ((), ())),   # emb @ x.T
        preferred_element_type=jnp.float32,
    ).astype(o_ref.dtype)


def _kernel_tn(x_ref, emb_ref, o_ref):
    # Direct orientation when N itself is lane-dense (N % 128 == 0):
    # o_ref : (TM, N) -- no wrapper transpose needed.
    o_ref[...] = lax.dot_general(
        x_ref[...], emb_ref[...],
        dimension_numbers=(((1,), (1,)), ((), ())),   # x @ emb.T
        preferred_element_type=jnp.float32,
    ).astype(o_ref.dtype)


def _vmem_capacity_bytes():
    """Physical VMEM of the current chip; conservative (v7x) default."""
    try:
        return int(pltpu.get_tpu_info().vmem_capacity_bytes)
    except Exception:
        return 64 * 1024 * 1024


def dot_scorer(xs_pad: jax.Array, spk_emb: jax.Array) -> jax.Array:
    """Batched dot-product scorer: (B, T, D) x (B, N, D) -> (B, T, N)."""
    B, T, D = xs_pad.shape
    Be, N, De = spk_emb.shape
    assert Be == B and De == D, "batch / hidden dims must match"

    out_dtype = jnp.result_type(xs_pad.dtype, spk_emb.dtype)

    x_item = jnp.dtype(xs_pad.dtype).itemsize
    o_item = jnp.dtype(out_dtype).itemsize
    xs_bytes = xs_pad.size * x_item

    # Generation-aware VMEM budget for our tiles (leave headroom for the
    # compiler / semaphores): ~40% of physical VMEM, capped.
    vmem_cap = _vmem_capacity_bytes()
    budget = max(8 << 20, min(int(vmem_cap * 0.4), 48 << 20))

    # Double-buffered footprints: resident emb (cast to xs dtype) is the fixed
    # term; x tile + out tile scale with the T tile size.
    fixed = 2 * N * D * x_item
    per_row = 2 * D * x_item + 2 * N * o_item
    tm_max = (budget - fixed) // max(per_row, 1)
    t_pad128 = ((T + 127) // 128) * 128

    # Fallback: per-call overhead dominated (few streamed bytes), T too small
    # for a 128-row tile, or spk_emb alone would blow the VMEM budget.
    if xs_bytes < (256 << 10) or T < 128 or tm_max < 128:
        return jnp.einsum("btd,bnd->btn", xs_pad, spk_emb,
                          preferred_element_type=jnp.float32).astype(out_dtype)

    # Never touch the streaming xs_pad in HBM; cast only the tiny spk_emb so
    # the MXU runs on xs_pad's native dtype (f32 accumulation in-kernel).
    if spk_emb.dtype != xs_pad.dtype:
        spk_emb = spk_emb.astype(xs_pad.dtype)

    # Largest 128-aligned T tile inside the budget (cap 8192: amortizes the
    # ~0.35us per-step pipeline overhead on v7x's fast HBM).
    tm = int(min(tm_max, 8192, t_pad128))
    tm = max(128, (tm // 128) * 128)
    num_t = pl.cdiv(T, tm)

    footprint = 2 * tm * D * x_item + fixed + 2 * N * tm * o_item
    vmem_limit = int(min(vmem_cap - (8 << 20),
                         max(footprint + (4 << 20), 16 << 20)))

    # Leading grid axis = T tiles, so v7x's two TensorCores split the large
    # axis even for B == 1.  No reduction axis (D lives inside the block).
    grid = (num_t, B)
    x_spec = pl.BlockSpec((pl.Squeezed(), tm, D), lambda t, b: (b, t, 0))
    e_spec = pl.BlockSpec((pl.Squeezed(), N, D), lambda t, b: (b, 0, 0))
    cparams = pltpu.CompilerParams(
        dimension_semantics=("parallel", "parallel"),
        vmem_limit_bytes=vmem_limit,
    )

    if N % 128 == 0:
        # N is already lane-dense: write (TM, N) tiles straight into the
        # (B, T, N) result, no transpose pass.
        return pl.pallas_call(
            _kernel_tn,
            out_shape=jax.ShapeDtypeStruct((B, T, N), out_dtype),
            grid_spec=pltpu.PrefetchScalarGridSpec(
                num_scalar_prefetch=0,
                grid=grid,
                in_specs=[x_spec, e_spec],
                out_specs=pl.BlockSpec((pl.Squeezed(), tm, N),
                                       lambda t, b: (b, t, 0)),
            ),
            compiler_params=cparams,
        )(xs_pad, spk_emb)

    # Small-N path: lane-dense (N, TM) tiles; ragged T is handled by Pallas
    # partial boundary blocks (no jnp.pad, OOB lanes masked on store).
    scores_nt = pl.pallas_call(
        _kernel_nt,
        out_shape=jax.ShapeDtypeStruct((B, N, T), out_dtype),
        grid_spec=pltpu.PrefetchScalarGridSpec(
            num_scalar_prefetch=0,
            grid=grid,
            in_specs=[x_spec, e_spec],
            out_specs=pl.BlockSpec((pl.Squeezed(), N, tm),
                                   lambda t, b: (b, 0, t)),
        ),
        compiler_params=cparams,
    )(xs_pad, spk_emb)

    # (B, N, T) -> (B, T, N). Only needed when N is lane-sparse; cost is
    # ~N/D of the xs_pad stream (a few percent for typical speaker counts).
    return jnp.swapaxes(scores_nt, 1, 2)


if __name__ == "__main__":
    key = jax.random.PRNGKey(0)
    kx, ke = jax.random.split(key)

    # 1) Main Pallas path: ragged T (partial boundary tile), tiny N ->
    #    (N, TM) lane-dense kernel + final transpose.
    B, T, D, N = 2, 1000, 96, 5
    xs_pad = jax.random.normal(kx, (B, T, D), dtype=jnp.float32)
    spk_emb = jax.random.normal(ke, (B, N, D), dtype=jnp.float32)
    scores = dot_scorer(xs_pad, spk_emb)
    jax.block_until_ready(scores)
    ref = jnp.einsum("btd,bnd->btn", xs_pad, spk_emb)
    assert scores.shape == (B, T, N)
    assert jnp.allclose(scores, ref, atol=1e-2, rtol=1e-2)

    # 2) Mixed precision: bf16 activations stream untouched (no HBM upcast);
    #    tiny emb is cast to bf16, accumulation in f32, output f32.
    xs_bf = xs_pad.astype(jnp.bfloat16)
    sc_bf = dot_scorer(xs_bf, spk_emb)
    jax.block_until_ready(sc_bf)
    ref_bf = jnp.einsum("btd,bnd->btn",
                        xs_bf.astype(jnp.float32),
                        spk_emb.astype(jnp.bfloat16).astype(jnp.float32))
    assert sc_bf.dtype == jnp.float32
    assert jnp.allclose(sc_bf, ref_bf, atol=1e-1, rtol=2e-2)

    # 3) Lane-dense N (N % 128 == 0): direct (TM, N) orientation, no transpose.
    Bn, Tn, Dn, Nn = 1, 1024, 128, 128
    xs_n = jax.random.normal(kx, (Bn, Tn, Dn), dtype=jnp.float32)
    emb_n = jax.random.normal(ke, (Bn, Nn, Dn), dtype=jnp.float32)
    sc_n = dot_scorer(xs_n, emb_n)
    jax.block_until_ready(sc_n)
    assert sc_n.shape == (Bn, Tn, Nn)
    assert jnp.allclose(sc_n, jnp.einsum("btd,bnd->btn", xs_n, emb_n),
                        atol=1e-2, rtol=1e-2)

    # 4) Tiny-shape path (overhead-dominated -> XLA einsum fallback).
    xs_s = jax.random.normal(kx, (2, 8, 32), dtype=jnp.float32)
    emb_s = jax.random.normal(ke, (2, 4, 32), dtype=jnp.float32)
    sc_s = dot_scorer(xs_s, emb_s)
    jax.block_until_ready(sc_s)
    assert sc_s.shape == (2, 8, 4)
    assert jnp.allclose(sc_s, jnp.einsum("btd,bnd->btn", xs_s, emb_s),
                        atol=1e-5, rtol=1e-5)

    print("KERNEL_OK")
</pallas_src>

<mosaic_0001>
module attributes {stable_mosaic.version = 11 : i64} {
  func.func @_kernel_nt(%arg0: i32, %arg1: i32, %arg2: memref<1x1024x96xf32, #tpu.memory_space<vmem>>, %arg3: memref<1x5x96xf32, #tpu.memory_space<vmem>>, %arg4: memref<1x5x1024xf32, #tpu.memory_space<vmem>>) attributes {dimension_semantics = [#tpu.dimension_semantics<parallel>, #tpu.dimension_semantics<parallel>], iteration_bounds = array<i64: 1, 2>, scalar_prefetch = 0 : i64, scratch_operands = 0 : i64, tpu.core_type = #tpu.core_type<tc>, window_params = [{transform_indices = @transform_0, window_bounds = array<i64: 1, 1024, 96>}, {transform_indices = @transform_1, window_bounds = array<i64: 1, 5, 96>}, {transform_indices = @transform_2, window_bounds = array<i64: 1, 5, 1024>}]} {
    %c0 = arith.constant 0 : index
    %c0_0 = arith.constant 0 : index
    %c0_1 = arith.constant 0 : index
    %0 = vector.load %arg3[%c0, %c0_0, %c0_1] : memref<1x5x96xf32, #tpu.memory_space<vmem>>, vector<1x5x96xf32>
    %1 = vector.shape_cast %0 : vector<1x5x96xf32> to vector<5x96xf32>
    %c0_2 = arith.constant 0 : index
    %c0_3 = arith.constant 0 : index
    %c0_4 = arith.constant 0 : index
    %2 = vector.load %arg2[%c0_2, %c0_3, %c0_4] : memref<1x1024x96xf32, #tpu.memory_space<vmem>>, vector<1x1024x96xf32>
    %3 = vector.shape_cast %2 : vector<1x1024x96xf32> to vector<1024x96xf32>
    %cst = arith.constant dense<0.000000e+00> : vector<5x1024xf32>
    %4 = tpu.matmul %1, %3, %cst {dimension_numbers = #tpu.dot_dimension_numbers<[1], [1], [0], [0], [0, 0, 1, 0], [], []>} : vector<5x96xf32>, vector<1024x96xf32>, vector<5x1024xf32> -> vector<5x1024xf32>
    %c0_5 = arith.constant 0 : index
    %c0_6 = arith.constant 0 : index
    %c0_7 = arith.constant 0 : index
    %5 = vector.load %arg4[%c0_5, %c0_6, %c0_7] : memref<1x5x1024xf32, #tpu.memory_space<vmem>>, vector<1x5x1024xf32>
    %6 = vector.shape_cast %5 : vector<1x5x1024xf32> to vector<5x1024xf32>
    %7 = vector.shape_cast %4 : vector<5x1024xf32> to vector<1x5x1024xf32>
    tpu.vector_store %arg4[%c0_5, %c0_6, %c0_7], %7 {strides = array<i32>} : memref<1x5x1024xf32, #tpu.memory_space<vmem>>, vector<1x5x1024xf32>,
    return
  }
  func.func @transform_0(%arg0: i32, %arg1: i32) -> (i32, i32, i32) {
    %c0_i32 = arith.constant 0 : i32
    %c0_i32_0 = arith.constant 0 : i32
    return %arg1, %arg0, %c0_i32 : i32, i32, i32
  }
  func.func @transform_1(%arg0: i32, %arg1: i32) -> (i32, i32, i32) {
    %c0_i32 = arith.constant 0 : i32
    %c0_i32_0 = arith.constant 0 : i32
    %c0_i32_1 = arith.constant 0 : i32
    return %arg1, %c0_i32, %c0_i32_0 : i32, i32, i32
  }
  func.func @transform_2(%arg0: i32, %arg1: i32) -> (i32, i32, i32) {
    %c0_i32 = arith.constant 0 : i32
    %c0_i32_0 = arith.constant 0 : i32
    return %arg1, %c0_i32, %arg0 : i32, i32, i32
  }
}

</mosaic_0001>

<llo_original>
// kernel: tpu_custom_call.1
$region0: #{tpu_custom_call.1}
  #allocation0 [shape = 'u32[]', space=smem, size = 0x4, offset = 0x4, fixed_abs, tag = 'smem constant byte address 0x4 - core index']
  #allocation1 [shape = 'u32[144,128]{1,0:T(1,128)}', space=vmem, size = 0x12000, scoped, tag = 'internal scratch']
  %s0 = inlined_call_operand.vmem [shape: f32[2,1000,96], index: 0, kind: input, shape index: {}]
  %s1 = inlined_call_operand.vmem [shape: f32[2,5,96], index: 1, kind: input, shape index: {}]
  %s2 = inlined_call_operand.vmem [shape: f32[2,5,1000], index: 2, kind: output, shape index: {}]
  %s3 = sld [smem:[#allocation0]]
  $region41: #{tpu_custom_call.1} parent=0
    _
  %s5 = ssub.s32 1, %s3
  %s6 = scalar_select 0, %s5, %s3
  loop: start=0, step=1, limit=4
  $region2: #{tpu_custom_call.1} parent=0 // loop_pre_header
    _
  $region3: #{tpu_custom_call.1} parent=0 // loop_header
    %s8 = sphi 0, %s12
    %p9 = scmp.ge.s32.totalorder %s8, 4
    %s15 = sphi 0, %s27
    %s16 = sphi 0, %s23
    %s17 = sphi 0, %s15
    %s18 = sphi 0, %s16
    %s19 = sphi 0, %s17
    %s20 = sphi 0, %s18
    %s32 = sphi 0, %s34
    %s35 = sphi 0, %s32
    %s36 = sphi 0, %s35
    %s52 = sphi 0, %s36
    %s58 = sphi 0, %s60
    %s61 = sphi 0, %s58
    %s62 = sphi 0, %s61
    %s78 = sphi 0, %s62
    %s86 = sphi 0, %s88
    %s89 = sphi 0, %s86
    %s90 = sphi 0, %s89
    %s106 = sphi 0, %s90
  $region4: #{tpu_custom_call.1} parent=0 // loop_header_branch
    %11 = sbr.rel (%p9) target = $region8
  $region5: #{tpu_custom_call.1} parent=0 // loop_body
    %s13 = ssub.s32 %s8, 1
    %s14 = ssub.s32 %s8, 2
    %s21 = sadd.s32 1, %s16
    %p22 = scmp.ge.s32.totalorder %s21, 2
    %s23 = scalar_select %p22, 0, %s21
    %s24 = sadd.s32 1, %s15
    %s25 = scalar_select %p22, %s24, %s15
    %p26 = scmp.ge.s32.totalorder %s25, 1
    %s27 = scalar_select %p26, 0, %s25
    %s28 = ssub.s32 %s16, %s23
    %s29 = ssub.s32 %s15, %s27
    %s30 = sor.u32 %s28, %s29
    %p31 = scmp.eq.s32.totalorder %s30, 0
    %s33 = sadd.s32 %s32, 1
    %s34 = scalar_select %p31, %s32, %s33
    %p37 = pneg %p31
    %p38 = scmp.eq.s32.totalorder %s8, 1
    %p39 = por %p37, %p38
    %p40 = scmp.ne.s32.totalorder %s32, %s35
    %p41 = scmp.eq.s32.totalorder %s8, 0
    %p42 = por %p40, %p41
    %p43 = scmp.ne.s32.totalorder %s32, %s35
    %p44 = scmp.eq.s32.totalorder %s13, 1
    %p45 = por %p43, %p44
    %p46 = scmp.ne.s32.totalorder %s35, %s36
    %p47 = scmp.eq.s32.totalorder %s13, 0
    %p48 = por %p46, %p47
    %p49 = scmp.ne.s32.totalorder %s35, %s36
    %p50 = scmp.eq.s32.totalorder %s14, 1
    %p51 = por %p49, %p50
    %p53 = scmp.ne.s32.totalorder %s36, %s52
    %p54 = scmp.eq.s32.totalorder %s14, 0
    %p55 = por %p53, %p54
    %s56 = ssub.s32 %s16, %s23
    %p57 = scmp.eq.s32.totalorder %s56, 0
    %s59 = sadd.s32 %s58, 1
    %s60 = scalar_select %p57, %s58, %s59
    %p63 = pneg %p57
    %p64 = scmp.eq.s32.totalorder %s8, 1
    %p65 = por %p63, %p64
    %p66 = scmp.ne.s32.totalorder %s58, %s61
    %p67 = scmp.eq.s32.totalorder %s8, 0
    %p68 = por %p66, %p67
    %p69 = scmp.ne.s32.totalorder %s58, %s61
    %p70 = scmp.eq.s32.totalorder %s13, 1
    %p71 = por %p69, %p70
    %p72 = scmp.ne.s32.totalorder %s61, %s62
    %p73 = scmp.eq.s32.totalorder %s13, 0
    %p74 = por %p72, %p73
    %p75 = scmp.ne.s32.totalorder %s61, %s62
    %p76 = scmp.eq.s32.totalorder %s14, 1
    %p77 = por %p75, %p76
    %p79 = scmp.ne.s32.totalorder %s62, %s78
    %p80 = scmp.eq.s32.totalorder %s14, 0
    %p81 = por %p79, %p80
    %s82 = ssub.s32 %s16, %s23
    %s83 = ssub.s32 %s15, %s27
    %s84 = sor.u32 %s82, %s83
    %p85 = scmp.eq.s32.totalorder %s84, 0
    %s87 = sadd.s32 %s86, 1
    %s88 = scalar_select %p85, %s86, %s87
    %p91 = pneg %p85
    %p92 = scmp.eq.s32.totalorder %s8, 1
    %p93 = por %p91, %p92
    %p94 = scmp.ne.s32.totalorder %s86, %s89
    %p95 = scmp.eq.s32.totalorder %s8, 0
    %p96 = por %p94, %p95
    %p97 = scmp.ne.s32.totalorder %s86, %s89
    %p98 = scmp.eq.s32.totalorder %s13, 1
    %p99 = por %p97, %p98
    %p100 = scmp.ne.s32.totalorder %s89, %s90
    %p101 = scmp.eq.s32.totalorder %s13, 0
    %p102 = por %p100, %p101
    %p103 = scmp.ne.s32.totalorder %s89, %s90
    %p104 = scmp.eq.s32.totalorder %s14, 1
    %p105 = por %p103, %p104
    %p107 = scmp.ne.s32.totalorder %s90, %s106
    %p108 = scmp.eq.s32.totalorder %s14, 0
    %p109 = por %p107, %p108
    %p110 = scmp.le.s32.totalorder 1, %s8
    %p111 = scmp.lt.s32.totalorder %s8, 3
    %p112 = pnand %p110, %p111
    %p113 = pneg %p112
    // Predicated region
    $region9: #{tpu_custom_call.1} parent=5 // pred_check
      _
    $region10: #{tpu_custom_call.1} parent=5 // pred_check_branch
      %115 = sbr.rel (%p112) target = $region12
    $region11: #{tpu_custom_call.1} parent=5 // pred_region
      %s116 = ssub.s32 %s8, 1
    $region12: #{tpu_custom_call.1} parent=5 // pred_fallthru
      _
    %p117 = scmp.lt.s32.totalorder %s8, 2
    // Predicated region
    $region13: #{tpu_custom_call.1} parent=5 // pred_check
      %p118 = pneg %p117
    $region14: #{tpu_custom_call.1} parent=5 // pred_check_branch
      %120 = sbr.rel (%p118) target = $region16
    $region15: #{tpu_custom_call.1} parent=5 // pred_region
      // Predicated region
      $region17: #{tpu_custom_call.1} parent=15 // pred_check
        %p121 = pneg %p42
      $region18: #{tpu_custom_call.1} parent=15 // pred_check_branch
        %123 = sbr.rel (%p121) target = $region20
      $region19: #{tpu_custom_call.1} parent=15 // pred_region
        %s124 = smul.u32 128, %s15
        %s125 = ssub.s32 125, %s124
        %s126 = smul.u32 128, %s125
        %p127 = scmp.lt.s32.totalorder %s16, 1
        %s128 = scalar_select %p127, %s16, 1
        %p129 = scmp.lt.s32.totalorder %s124, 124
        %s130 = scalar_select %p129, %s124, 124
        %s131 = smul.addr %s128, 125
        %s132 = sadd.s32 %s130, %s131
        %s133 = smul.addr %s132, 8
        %s134 = scalar_lea.vmem %s0, %s133
        %s135 = smul.u32 128, %s15
        %s136 = ssub.s32 125, %s135
        %s137 = smul.u32 128, %s136
      $region20: #{tpu_custom_call.1} parent=15 // pred_fallthru
        _
      // Predicated region
      $region21: #{tpu_custom_call.1} parent=15 // pred_check
        %p138 = pneg %p68
      $region22: #{tpu_custom_call.1} parent=15 // pred_check_branch
        %140 = sbr.rel (%p138) target = $region24
      $region23: #{tpu_custom_call.1} parent=15 // pred_region
        %p141 = scmp.lt.s32.totalorder %s16, 1
        %s142 = scalar_select %p141, %s16, 1
        %s143 = smul.addr %s142, 8
        %s144 = scalar_lea.vmem %s1, %s143
      $region24: #{tpu_custom_call.1} parent=15 // pred_fallthru
        _
    $region16: #{tpu_custom_call.1} parent=5 // pred_fallthru
      _
    %p145 = scmp.le.s32.totalorder 1, %s8
    %p146 = scmp.lt.s32.totalorder %s8, 3
    %p147 = pnand %p145, %p146
    %p148 = pneg %p147
    // Predicated region
    $region25: #{tpu_custom_call.1} parent=5 // pred_check
      _
    $region26: #{tpu_custom_call.1} parent=5 // pred_check_branch
      %150 = sbr.rel (%p147) target = $region28
    $region27: #{tpu_custom_call.1} parent=5 // pred_region
      %s151 = ssub.s32 %s8, 1
      %s152 = smul.u32 128, %s17
      %s153 = ssub.s32 125, %s152
      %s154 = smul.u32 128, %s153
      %p155 = scmp.lt.s32.totalorder %s18, 1
      %s156 = scalar_select %p155, %s18, 1
      %p157 = scmp.lt.s32.totalorder %s152, 124
      %s158 = scalar_select %p157, %s152, 124
      %s159 = smul.addr %s156, 125
      %s160 = sadd.s32 %s158, %s159
      %s161 = smul.addr %s160, 8
      %s162 = scalar_lea.vmem %s0, %s161
      %p163 = pneg %p48
      %p164 = pneg %p45
      %p165 = scmp.lt.s32.totalorder %s18, 1
      %s166 = scalar_select %p165, %s18, 1
      %s167 = smul.addr %s166, 8
      %s168 = scalar_lea.vmem %s1, %s167
      %p169 = pneg %p74
      %p170 = pneg %p71
      %p171 = pneg %p102
      %p172 = pneg %p99
      %s173 = smul.u32 8, %s17
      %p174 = scmp.lt.s32.totalorder %s18, 1
      %s175 = scalar_select %p174, %s18, 1
      %p176 = scmp.lt.s32.totalorder %s173, 7
      %s177 = scalar_select %p176, %s173, 7
      %s178 = smul.addr %s175, 8
      %s179 = sadd.s32 %s177, %s178
      %s180 = smul.addr %s179, 8
      %s181 = scalar_lea.vmem %s2, %s180
      %s182 = smul.u32 128, %s17
      %s183 = ssub.s32 125, %s182
      %s184 = smul.u32 128, %s183
      %p185 = scmp.lt.s32.totalorder %s18, 1
      %s186 = scalar_select %p185, %s18, 1
      %p187 = scmp.lt.s32.totalorder %s182, 124
      %s188 = scalar_select %p187, %s182, 124
      %s189 = smul.addr %s186, 125
      %s190 = sadd.s32 %s188, %s189
      %s191 = smul.addr %s190, 8
      %s192 = scalar_lea.vmem %s0, %s191
      %s193 = smul.u32 128, %s17
      %s194 = ssub.s32 125, %s193
      %s195 = smul.u32 128, %s194
      %p196 = scmp.lt.s32.totalorder %s18, 1
      %s197 = scalar_select %p196, %s18, 1
      %s198 = smul.addr %s197, 8
      %s199 = scalar_lea.vmem %s1, %s198
      %s200 = smul.u32 8, %s17
      %p201 = scmp.lt.s32.totalorder %s18, 1
      %s202 = scalar_select %p201, %s18, 1
      %p203 = scmp.lt.s32.totalorder %s200, 7
      %s204 = scalar_select %p203, %s200, 7
      %s205 = smul.addr %s202, 8
      %s206 = sadd.s32 %s204, %s205
      %s207 = smul.addr %s206, 8
      %s208 = scalar_lea.vmem %s2, %s207
      %s209 = smul.u32 8, %s17
      %v210 = vld [vmem:[%s199] sm:$0x1f]
      %v211 = vld [vmem:[%s192] sm:$0xff]
      %v212 = vld [vmem:[%s192 + $0x8] sm:$0xff]
      %v213 = vld [vmem:[%s192 + $0x10] sm:$0xff]
      %v214 = vld [vmem:[%s192 + $0x18] sm:$0xff]
      %v215 = vld [vmem:[%s192 + $0x20] sm:$0xff]
      %v216 = vld [vmem:[%s192 + $0x28] sm:$0xff]
      %v217 = vld [vmem:[%s192 + $0x30] sm:$0xff]
      %v218 = vld [vmem:[%s192 + $0x38] sm:$0xff]
      %v219 = vld [vmem:[%s192 + $0x40] sm:$0xff]
      %v220 = vld [vmem:[%s192 + $0x48] sm:$0xff]
      %v221 = vld [vmem:[%s192 + $0x50] sm:$0xff]
      %v222 = vld [vmem:[%s192 + $0x58] sm:$0xff]
      %v223 = vld [vmem:[%s192 + $0x60] sm:$0xff]
      %v224 = vld [vmem:[%s192 + $0x68] sm:$0xff]
      %v225 = vld [vmem:[%s192 + $0x70] sm:$0xff]
      %v226 = vld [vmem:[%s192 + $0x78] sm:$0xff]
      %v227 = vld [vmem:[%s192 + $0x80] sm:$0xff]
      %v228 = vld [vmem:[%s192 + $0x88] sm:$0xff]
      %v229 = vld [vmem:[%s192 + $0x90] sm:$0xff]
      %v230 = vld [vmem:[%s192 + $0x98] sm:$0xff]
      %v231 = vld [vmem:[%s192 + $0xa0] sm:$0xff]
      %v232 = vld [vmem:[%s192 + $0xa8] sm:$0xff]
      %v233 = vld [vmem:[%s192 + $0xb0] sm:$0xff]
      %v234 = vld [vmem:[%s192 + $0xb8] sm:$0xff]
      %v235 = vld [vmem:[%s192 + $0xc0] sm:$0xff]
      %v236 = vld [vmem:[%s192 + $0xc8] sm:$0xff]
      %v237 = vld [vmem:[%s192 + $0xd0] sm:$0xff]
      %v238 = vld [vmem:[%s192 + $0xd8] sm:$0xff]
      %v239 = vld [vmem:[%s192 + $0xe0] sm:$0xff]
      %v240 = vld [vmem:[%s192 + $0xe8] sm:$0xff]
      %v241 = vld [vmem:[%s192 + $0xf0] sm:$0xff]
      %v242 = vld [vmem:[%s192 + $0xf8] sm:$0xff]
      %v243 = vld [vmem:[%s192 + $0x100] sm:$0xff]
      %v244 = vld [vmem:[%s192 + $0x108] sm:$0xff]
      %v245 = vld [vmem:[%s192 + $0x110] sm:$0xff]
      %v246 = vld [vmem:[%s192 + $0x118] sm:$0xff]
      %v247 = vld [vmem:[%s192 + $0x120] sm:$0xff]
      %v248 = vld [vmem:[%s192 + $0x128] sm:$0xff]
      %v249 = vld [vmem:[%s192 + $0x130] sm:$0xff]
      %v250 = vld [vmem:[%s192 + $0x138] sm:$0xff]
      %v251 = vld [vmem:[%s192 + $0x140] sm:$0xff]
      %v252 = vld [vmem:[%s192 + $0x148] sm:$0xff]
      %v253 = vld [vmem:[%s192 + $0x150] sm:$0xff]
      %v254 = vld [vmem:[%s192 + $0x158] sm:$0xff]
      %v255 = vld [vmem:[%s192 + $0x160] sm:$0xff]
      %v256 = vld [vmem:[%s192 + $0x168] sm:$0xff]
      %v257 = vld [vmem:[%s192 + $0x170] sm:$0xff]
      %v258 = vld [vmem:[%s192 + $0x178] sm:$0xff]
      %v259 = vld [vmem:[%s192 + $0x180] sm:$0xff]
      %v260 = vld [vmem:[%s192 + $0x188] sm:$0xff]
      %v261 = vld [vmem:[%s192 + $0x190] sm:$0xff]
      %v262 = vld [vmem:[%s192 + $0x198] sm:$0xff]
      %v263 = vld [vmem:[%s192 + $0x1a0] sm:$0xff]
      %v264 = vld [vmem:[%s192 + $0x1a8] sm:$0xff]
      %v265 = vld [vmem:[%s192 + $0x1b0] sm:$0xff]
      %v266 = vld [vmem:[%s192 + $0x1b8] sm:$0xff]
      %v267 = vld [vmem:[%s192 + $0x1c0] sm:$0xff]
      %v268 = vld [vmem:[%s192 + $0x1c8] sm:$0xff]
      %v269 = vld [vmem:[%s192 + $0x1d0] sm:$0xff]
      %v270 = vld [vmem:[%s192 + $0x1d8] sm:$0xff]
      %v271 = vld [vmem:[%s192 + $0x1e0] sm:$0xff]
      %v272 = vld [vmem:[%s192 + $0x1e8] sm:$0xff]
      %v273 = vld [vmem:[%s192 + $0x1f0] sm:$0xff]
      %v274 = vld [vmem:[%s192 + $0x1f8] sm:$0xff]
      %v275 = vld [vmem:[%s192 + $0x200] sm:$0xff]
      %v276 = vld [vmem:[%s192 + $0x208] sm:$0xff]
      %v277 = vld [vmem:[%s192 + $0x210] sm:$0xff]
      %v278 = vld [vmem:[%s192 + $0x218] sm:$0xff]
      %v279 = vld [vmem:[%s192 + $0x220] sm:$0xff]
      %v280 = vld [vmem:[%s192 + $0x228] sm:$0xff]
      %v281 = vld [vmem:[%s192 + $0x230] sm:$0xff]
      %v282 = vld [vmem:[%s192 + $0x238] sm:$0xff]
      %v283 = vld [vmem:[%s192 + $0x240] sm:$0xff]
      %v284 = vld [vmem:[%s192 + $0x248] sm:$0xff]
      %v285 = vld [vmem:[%s192 + $0x250] sm:$0xff]
      %v286 = vld [vmem:[%s192 + $0x258] sm:$0xff]
      %v287 = vld [vmem:[%s192 + $0x260] sm:$0xff]
      %v288 = vld [vmem:[%s192 + $0x268] sm:$0xff]
      %v289 = vld [vmem:[%s192 + $0x270] sm:$0xff]
      %v290 = vld [vmem:[%s192 + $0x278] sm:$0xff]
      %v291 = vld [vmem:[%s192 + $0x280] sm:$0xff]
      %v292 = vld [vmem:[%s192 + $0x288] sm:$0xff]
      %v293 = vld [vmem:[%s192 + $0x290] sm:$0xff]
      %v294 = vld [vmem:[%s192 + $0x298] sm:$0xff]
      %v295 = vld [vmem:[%s192 + $0x2a0] sm:$0xff]
      %v296 = vld [vmem:[%s192 + $0x2a8] sm:$0xff]
      %v297 = vld [vmem:[%s192 + $0x2b0] sm:$0xff]
      %v298 = vld [vmem:[%s192 + $0x2b8] sm:$0xff]
      %v299 = vld [vmem:[%s192 + $0x2c0] sm:$0xff]
      %v300 = vld [vmem:[%s192 + $0x2c8] sm:$0xff]
      %v301 = vld [vmem:[%s192 + $0x2d0] sm:$0xff]
      %v302 = vld [vmem:[%s192 + $0x2d8] sm:$0xff]
      %v303 = vld [vmem:[%s192 + $0x2e0] sm:$0xff]
      %v304 = vld [vmem:[%s192 + $0x2e8] sm:$0xff]
      %v305 = vld [vmem:[%s192 + $0x2f0] sm:$0xff]
      %v306 = vld [vmem:[%s192 + $0x2f8] sm:$0xff]
      %v307 = vld [vmem:[%s192 + $0x300] sm:$0xff]
      %v308 = vld [vmem:[%s192 + $0x308] sm:$0xff]
      %v309 = vld [vmem:[%s192 + $0x310] sm:$0xff]
      %v310 = vld [vmem:[%s192 + $0x318] sm:$0xff]
      %v311 = vld [vmem:[%s192 + $0x320] sm:$0xff]
      %v312 = vld [vmem:[%s192 + $0x328] sm:$0xff]
      %v313 = vld [vmem:[%s192 + $0x330] sm:$0xff]
      %v314 = vld [vmem:[%s192 + $0x338] sm:$0xff]
      %v315 = vld [vmem:[%s192 + $0x340] sm:$0xff]
      %v316 = vld [vmem:[%s192 + $0x348] sm:$0xff]
      %v317 = vld [vmem:[%s192 + $0x350] sm:$0xff]
      %v318 = vld [vmem:[%s192 + $0x358] sm:$0xff]
      %v319 = vld [vmem:[%s192 + $0x360] sm:$0xff]
      %v320 = vld [vmem:[%s192 + $0x368] sm:$0xff]
      %v321 = vld [vmem:[%s192 + $0x370] sm:$0xff]
      %v322 = vld [vmem:[%s192 + $0x378] sm:$0xff]
      %v323 = vld [vmem:[%s192 + $0x380] sm:$0xff]
      %v324 = vld [vmem:[%s192 + $0x388] sm:$0xff]
      %v325 = vld [vmem:[%s192 + $0x390] sm:$0xff]
      %v326 = vld [vmem:[%s192 + $0x398] sm:$0xff]
      %v327 = vld [vmem:[%s192 + $0x3a0] sm:$0xff]
      %v328 = vld [vmem:[%s192 + $0x3a8] sm:$0xff]
      %v329 = vld [vmem:[%s192 + $0x3b0] sm:$0xff]
      %v330 = vld [vmem:[%s192 + $0x3b8] sm:$0xff]
      %v331 = vld [vmem:[%s192 + $0x3c0] sm:$0xff]
      %v332 = vld [vmem:[%s192 + $0x3c8] sm:$0xff]
      %v333 = vld [vmem:[%s192 + $0x3d0] sm:$0xff]
      %v334 = vld [vmem:[%s192 + $0x3d8] sm:$0xff]
      %v335 = vld [vmem:[%s192 + $0x3e0] sm:$0xff]
      %v336 = vld [vmem:[%s192 + $0x3e8] sm:$0xff]
      %v337 = vld [vmem:[%s192 + $0x3f0] sm:$0xff]
      %v338 = vld [vmem:[%s192 + $0x3f8] sm:$0xff]
      %vm339 = vcmask 785408
      %v341 = vsel %vm339, %v210, 0
      %v344 = vsel %vm339, %v211, 0
      %v347 = vsel %vm339, %v212, 0
      %v350 = vsel %vm339, %v213, 0
      %v353 = vsel %vm339, %v214, 0
      %v356 = vsel %vm339, %v215, 0
      %v359 = vsel %vm339, %v216, 0
      %v362 = vsel %vm339, %v217, 0
      %v365 = vsel %vm339, %v218, 0
      %v368 = vsel %vm339, %v219, 0
      %v371 = vsel %vm339, %v220, 0
      %v374 = vsel %vm339, %v221, 0
      %v377 = vsel %vm339, %v222, 0
      %v380 = vsel %vm339, %v223, 0
      %v383 = vsel %vm339, %v224, 0
      %v386 = vsel %vm339, %v225, 0
      %v389 = vsel %vm339, %v226, 0
      %v392 = vsel %vm339, %v227, 0
      %v395 = vsel %vm339, %v228, 0
      %v398 = vsel %vm339, %v229, 0
      %v401 = vsel %vm339, %v230, 0
      %v404 = vsel %vm339, %v231, 0
      %v407 = vsel %vm339, %v232, 0
      %v410 = vsel %vm339, %v233, 0
      %v413 = vsel %vm339, %v234, 0
      %v416 = vsel %vm339, %v235, 0
      %v419 = vsel %vm339, %v236, 0
      %v422 = vsel %vm339, %v237, 0
      %v425 = vsel %vm339, %v238, 0
      %v428 = vsel %vm339, %v239, 0
      %v431 = vsel %vm339, %v240, 0
      %v434 = vsel %vm339, %v241, 0
      %v437 = vsel %vm339, %v242, 0
      %v440 = vsel %vm339, %v243, 0
      %v443 = vsel %vm339, %v244, 0
      %v446 = vsel %vm339, %v245, 0
      %v449 = vsel %vm339, %v246, 0
      %v452 = vsel %vm339, %v247, 0
      %v455 = vsel %vm339, %v248, 0
      %v458 = vsel %vm339, %v249, 0
      %v461 = vsel %vm339, %v250, 0
      %v464 = vsel %vm339, %v251, 0
      %v467 = vsel %vm339, %v252, 0
      %v470 = vsel %vm339, %v253, 0
      %v473 = vsel %vm339, %v254, 0
      %v476 = vsel %vm339, %v255, 0
      %v479 = vsel %vm339, %v256, 0
      %v482 = vsel %vm339, %v257, 0
      %v485 = vsel %vm339, %v258, 0
      %v488 = vsel %vm339, %v259, 0
      %v491 = vsel %vm339, %v260, 0
      %v494 = vsel %vm339, %v261, 0
      %v497 = vsel %vm339, %v262, 0
      %v500 = vsel %vm339, %v263, 0
      %v503 = vsel %vm339, %v264, 0
      %v506 = vsel %vm339, %v265, 0
      %v509 = vsel %vm339, %v266, 0
      %v512 = vsel %vm339, %v267, 0
      %v515 = vsel %vm339, %v268, 0
      %v518 = vsel %vm339, %v269, 0
      %v521 = vsel %vm339, %v270, 0
      %v524 = vsel %vm339, %v271, 0
      %v527 = vsel %vm339, %v272, 0
      %v530 = vsel %vm339, %v273, 0
      %v533 = vsel %vm339, %v274, 0
      %v536 = vsel %vm339, %v275, 0
      %v539 = vsel %vm339, %v276, 0
      %v542 = vsel %vm339, %v277, 0
      %v545 = vsel %vm339, %v278, 0
      %v548 = vsel %vm339, %v279, 0
      %v551 = vsel %vm339, %v280, 0
      %v554 = vsel %vm339, %v281, 0
      %v557 = vsel %vm339, %v282, 0
      %v560 = vsel %vm339, %v283, 0
      %v563 = vsel %vm339, %v284, 0
      %v566 = vsel %vm339, %v285, 0
      %v569 = vsel %vm339, %v286, 0
      %v572 = vsel %vm339, %v287, 0
      %v575 = vsel %vm339, %v288, 0
      %v578 = vsel %vm339, %v289, 0
      %v581 = vsel %vm339, %v290, 0
      %v584 = vsel %vm339, %v291, 0
      %v587 = vsel %vm339, %v292, 0
      %v590 = vsel %vm339, %v293, 0
      %v593 = vsel %vm339, %v294, 0
      %v596 = vsel %vm339, %v295, 0
      %v599 = vsel %vm339, %v296, 0
      %v602 = vsel %vm339, %v297, 0
      %v605 = vsel %vm339, %v298, 0
      %v608 = vsel %vm339, %v299, 0
      %v611 = vsel %vm339, %v300, 0
      %v614 = vsel %vm339, %v301, 0
      %v617 = vsel %vm339, %v302, 0
      %v620 = vsel %vm339, %v303, 0
      %v623 = vsel %vm339, %v304, 0
      %v626 = vsel %vm339, %v305, 0
      %v629 = vsel %vm339, %v306, 0
      %v632 = vsel %vm339, %v307, 0
      %v635 = vsel %vm339, %v308, 0
      %v638 = vsel %vm339, %v309, 0
      %v641 = vsel %vm339, %v310, 0
      %v644 = vsel %vm339, %v311, 0
      %v647 = vsel %vm339, %v312, 0
      %v650 = vsel %vm339, %v313, 0
      %v653 = vsel %vm339, %v314, 0
      %v656 = vsel %vm339, %v315, 0
      %v659 = vsel %vm339, %v316, 0
      %v662 = vsel %vm339, %v317, 0
      %v665 = vsel %vm339, %v318, 0
      %v668 = vsel %vm339, %v319, 0
      %v671 = vsel %vm339, %v320, 0
      %v674 = vsel %vm339, %v321, 0
      %v677 = vsel %vm339, %v322, 0
      %v680 = vsel %vm339, %v323, 0
      %v683 = vsel %vm339, %v324, 0
      %v686 = vsel %vm339, %v325, 0
      %v689 = vsel %vm339, %v326, 0
      %v692 = vsel %vm339, %v327, 0
      %v695 = vsel %vm339, %v328, 0
      %v698 = vsel %vm339, %v329, 0
      %v701 = vsel %vm339, %v330, 0
      %v704 = vsel %vm339, %v331, 0
      %v707 = vsel %vm339, %v332, 0
      %v710 = vsel %vm339, %v333, 0
      %v713 = vsel %vm339, %v334, 0
      %v716 = vsel %vm339, %v335, 0
      %v719 = vsel %vm339, %v336, 0
      %v722 = vsel %vm339, %v337, 0
      %v725 = vsel %vm339, %v338, 0
      %727 = vmatprep.subr.mxu0 0.0
      %728 = vmatpush1.xpose.msra.mxu0 %v344
      %729 = vmatprep.subr.mxu0 0.0
      %730 = vmatpush1.xpose.msra.mxu0 %v347
      %731 = vmatprep.subr.mxu0 0.0
      %732 = vmatpush1.xpose.msra.mxu0 %v350
      %733 = vmatprep.subr.mxu0 0.0
      %734 = vmatpush1.xpose.msra.mxu0 %v353
      %735 = vmatprep.subr.mxu0 0.0
      %736 = vmatpush1.xpose.msra.mxu0 %v356
      %737 = vmatprep.subr.mxu0 0.0
      %738 = vmatpush1.xpose.msra.mxu0 %v359
      %739 = vmatprep.subr.mxu0 0.0
      %740 = vmatpush1.xpose.msra.mxu0 %v362
      %741 = vmatprep.subr.mxu0 0.0
      %742 = vmatpush1.xpose.msra.mxu0 %v365
      %743 = vmatprep.subr.mxu0 0.0
      %744 = vmatpush1.xpose.msra.mxu0 %v368
      %745 = vmatprep.subr.mxu0 0.0
      %746 = vmatpush1.xpose.msra.mxu0 %v371
      %747 = vmatprep.subr.mxu0 0.0
      %748 = vmatpush1.xpose.msra.mxu0 %v374
      %749 = vmatprep.subr.mxu0 0.0
      %750 = vmatpush1.xpose.msra.mxu0 %v377
      %751 = vmatprep.subr.mxu0 0.0
      %752 = vmatpush1.xpose.msra.mxu0 %v380
      %753 = vmatprep.subr.mxu0 0.0
      %754 = vmatpush1.xpose.msra.mxu0 %v383
      %755 = vmatprep.subr.mxu0 0.0
      %756 = vmatpush1.xpose.msra.mxu0 %v386
      %757 = vmatprep.subr.mxu0 0.0
      %758 = vmatpush1.xpose.msra.mxu0 %v389
      %759 = vmatprep.subr.mxu0 0.0
      %760 = vmatpush1.xpose.msra.mxu0 %v392
      %761 = vmatprep.subr.mxu0 0.0
      %762 = vmatpush1.xpose.msra.mxu0 %v395
      %763 = vmatprep.subr.mxu0 0.0
      %764 = vmatpush1.xpose.msra.mxu0 %v398
      %765 = vmatprep.subr.mxu0 0.0
      %766 = vmatpush1.xpose.msra.mxu0 %v401
      %767 = vmatprep.subr.mxu0 0.0
      %768 = vmatpush1.xpose.msra.mxu0 %v404
      %769 = vmatprep.subr.mxu0 0.0
      %770 = vmatpush1.xpose.msra.mxu0 %v407
      %771 = vmatprep.subr.mxu0 0.0
      %772 = vmatpush1.xpose.msra.mxu0 %v410
      %773 = vmatprep.subr.mxu0 0.0
      %774 = vmatpush1.xpose.msra.mxu0 %v413
      %775 = vmatprep.subr.mxu0 0.0
      %776 = vmatpush1.xpose.msra.mxu0 %v416
      %777 = vmatprep.subr.mxu0 0.0
      %778 = vmatpush1.xpose.msra.mxu0 %v419
      %779 = vmatprep.subr.mxu0 0.0
      %780 = vmatpush1.xpose.msra.mxu0 %v422
      %781 = vmatprep.subr.mxu0 0.0
      %782 = vmatpush1.xpose.msra.mxu0 %v425
      %783 = vmatprep.subr.mxu0 0.0
      %784 = vmatpush1.xpose.msra.mxu0 %v428
      %785 = vmatprep.subr.mxu0 0.0
      %786 = vmatpush1.xpose.msra.mxu0 %v431
      %787 = vmatprep.subr.mxu0 0.0
      %788 = vmatpush1.xpose.msra.mxu0 %v434
      %789 = vmatprep.subr.mxu0 0.0
      %790 = vmatpush1.xpose.msra.mxu0 %v437
      %791 = vmatprep.mubr.f32.mxu0 0.0
      %792 = vmatmul.mubr.f32.gmra.mrb[0].mxu0 %v341
      %v793 = vpop.f32.mrb[0].mxu0
      %v794 = vadd.f32 0.0, %v793
      %v795 = vpop.f32.mrb[0].mxu0
      %v796 = vadd.f32 0.0, %v795
      %797 = vdwg.mxu0
      %798 = vmatprep.subr.mxu0 0.0
      %799 = vmatpush1.xpose.msra.mxu0 %v440
      %800 = vmatprep.subr.mxu0 0.0
      %801 = vmatpush1.xpose.msra.mxu0 %v443
      %802 = vmatprep.subr.mxu0 0.0
      %803 = vmatpush1.xpose.msra.mxu0 %v446
      %804 = vmatprep.subr.mxu0 0.0
      %805 = vmatpush1.xpose.msra.mxu0 %v449
      %806 = vmatprep.subr.mxu0 0.0
      %807 = vmatpush1.xpose.msra.mxu0 %v452
      %808 = vmatprep.subr.mxu0 0.0
      %809 = vmatpush1.xpose.msra.mxu0 %v455
      %810 = vmatprep.subr.mxu0 0.0
      %811 = vmatpush1.xpose.msra.mxu0 %v458
      %812 = vmatprep.subr.mxu0 0.0
      %813 = vmatpush1.xpose.msra.mxu0 %v461
      %814 = vmatprep.subr.mxu0 0.0
      %815 = vmatpush1.xpose.msra.mxu0 %v464
      %816 = vmatprep.subr.mxu0 0.0
      %817 = vmatpush1.xpose.msra.mxu0 %v467
      %818 = vmatprep.subr.mxu0 0.0
      %819 = vmatpush1.xpose.msra.mxu0 %v470
      %820 = vmatprep.subr.mxu0 0.0
      %821 = vmatpush1.xpose.msra.mxu0 %v473
      %822 = vmatprep.subr.mxu0 0.0
      %823 = vmatpush1.xpose.msra.mxu0 %v476
      %824 = vmatprep.subr.mxu0 0.0
      %825 = vmatpush1.xpose.msra.mxu0 %v479
      %826 = vmatprep.subr.mxu0 0.0
      %827 = vmatpush1.xpose.msra.mxu0 %v482
      %828 = vmatprep.subr.mxu0 0.0
      %829 = vmatpush1.xpose.msra.mxu0 %v485
      %830 = vmatprep.subr.mxu0 0.0
      %831 = vmatpush1.xpose.msra.mxu0 %v488
      %832 = vmatprep.subr.mxu0 0.0
      %833 = vmatpush1.xpose.msra.mxu0 %v491
      %834 = vmatprep.subr.mxu0 0.0
      %835 = vmatpush1.xpose.msra.mxu0 %v494
      %836 = vmatprep.subr.mxu0 0.0
      %837 = vmatpush1.xpose.msra.mxu0 %v497
      %838 = vmatprep.subr.mxu0 0.0
      %839 = vmatpush1.xpose.msra.mxu0 %v500
      %840 = vmatprep.subr.mxu0 0.0
      %841 = vmatpush1.xpose.msra.mxu0 %v503
      %842 = vmatprep.subr.mxu0 0.0
      %843 = vmatpush1.xpose.msra.mxu0 %v506
      %844 = vmatprep.subr.mxu0 0.0
      %845 = vmatpush1.xpose.msra.mxu0 %v509
      %846 = vmatprep.subr.mxu0 0.0
      %847 = vmatpush1.xpose.msra.mxu0 %v512
      %848 = vmatprep.subr.mxu0 0.0
      %849 = vmatpush1.xpose.msra.mxu0 %v515
      %850 = vmatprep.subr.mxu0 0.0
      %851 = vmatpush1.xpose.msra.mxu0 %v518
      %852 = vmatprep.subr.mxu0 0.0
      %853 = vmatpush1.xpose.msra.mxu0 %v521
      %854 = vmatprep.subr.mxu0 0.0
      %855 = vmatpush1.xpose.msra.mxu0 %v524
      %856 = vmatprep.subr.mxu0 0.0
      %857 = vmatpush1.xpose.msra.mxu0 %v527
      %858 = vmatprep.subr.mxu0 0.0
      %859 = vmatpush1.xpose.msra.mxu0 %v530
      %860 = vmatprep.subr.mxu0 0.0
      %861 = vmatpush1.xpose.msra.mxu0 %v533
      %862 = vmatprep.mubr.f32.mxu0 0.0
      %863 = vmatmul.mubr.f32.gmra.mrb[0].mxu0 %v341
      %v864 = vpop.f32.mrb[0].mxu0
      %v865 = vadd.f32 0.0, %v864
      %v866 = vpop.f32.mrb[0].mxu0
      %v867 = vadd.f32 0.0, %v866
      %868 = vdwg.mxu0
      %869 = vmatprep.subr.mxu0 0.0
      %870 = vmatpush1.xpose.msra.mxu0 %v536
      %871 = vmatprep.subr.mxu0 0.0
      %872 = vmatpush1.xpose.msra.mxu0 %v539
      %873 = vmatprep.subr.mxu0 0.0
      %874 = vmatpush1.xpose.msra.mxu0 %v542
      %875 = vmatprep.subr.mxu0 0.0
      %876 = vmatpush1.xpose.msra.mxu0 %v545
      %877 = vmatprep.subr.mxu0 0.0
      %878 = vmatpush1.xpose.msra.mxu0 %v548
      %879 = vmatprep.subr.mxu0 0.0
      %880 = vmatpush1.xpose.msra.mxu0 %v551
      %881 = vmatprep.subr.mxu0 0.0
      %882 = vmatpush1.xpose.msra.mxu0 %v554
      %883 = vmatprep.subr.mxu0 0.0
      %884 = vmatpush1.xpose.msra.mxu0 %v557
      %885 = vmatprep.subr.mxu0 0.0
      %886 = vmatpush1.xpose.msra.mxu0 %v560
      %887 = vmatprep.subr.mxu0 0.0
      %888 = vmatpush1.xpose.msra.mxu0 %v563
      %889 = vmatprep.subr.mxu0 0.0
      %890 = vmatpush1.xpose.msra.mxu0 %v566
      %891 = vmatprep.subr.mxu0 0.0
      %892 = vmatpush1.xpose.msra.mxu0 %v569
      %893 = vmatprep.subr.mxu0 0.0
      %894 = vmatpush1.xpose.msra.mxu0 %v572
      %895 = vmatprep.subr.mxu0 0.0
      %896 = vmatpush1.xpose.msra.mxu0 %v575
      %897 = vmatprep.subr.mxu0 0.0
      %898 = vmatpush1.xpose.msra.mxu0 %v578
      %899 = vmatprep.subr.mxu0 0.0
      %900 = vmatpush1.xpose.msra.mxu0 %v581
      %901 = vmatprep.subr.mxu0 0.0
      %902 = vmatpush1.xpose.msra.mxu0 %v584
      %903 = vmatprep.subr.mxu0 0.0
      %904 = vmatpush1.xpose.msra.mxu0 %v587
      %905 = vmatprep.subr.mxu0 0.0
      %906 = vmatpush1.xpose.msra.mxu0 %v590
      %907 = vmatprep.subr.mxu0 0.0
      %908 = vmatpush1.xpose.msra.mxu0 %v593
      %909 = vmatprep.subr.mxu0 0.0
      %910 = vmatpush1.xpose.msra.mxu0 %v596
      %911 = vmatprep.subr.mxu0 0.0
      %912 = vmatpush1.xpose.msra.mxu0 %v599
      %913 = vmatprep.subr.mxu0 0.0
      %914 = vmatpush1.xpose.msra.mxu0 %v602
      %915 = vmatprep.subr.mxu0 0.0
      %916 = vmatpush1.xpose.msra.mxu0 %v605
      %917 = vmatprep.subr.mxu0 0.0
      %918 = vmatpush1.xpose.msra.mxu0 %v608
      %919 = vmatprep.subr.mxu0 0.0
      %920 = vmatpush1.xpose.msra.mxu0 %v611
      %921 = vmatprep.subr.mxu0 0.0
      %922 = vmatpush1.xpose.msra.mxu0 %v614
      %923 = vmatprep.subr.mxu0 0.0
      %924 = vmatpush1.xpose.msra.mxu0 %v617
      %925 = vmatprep.subr.mxu0 0.0
      %926 = vmatpush1.xpose.msra.mxu0 %v620
      %927 = vmatprep.subr.mxu0 0.0
      %928 = vmatpush1.xpose.msra.mxu0 %v623
      %929 = vmatprep.subr.mxu0 0.0
      %930 = vmatpush1.xpose.msra.mxu0 %v626
      %931 = vmatprep.subr.mxu0 0.0
      %932 = vmatpush1.xpose.msra.mxu0 %v629
      %933 = vmatprep.mubr.f32.mxu0 0.0
      %934 = vmatmul.mubr.f32.gmra.mrb[0].mxu0 %v341
      %v935 = vpop.f32.mrb[0].mxu0
      %v936 = vadd.f32 0.0, %v935
      %v937 = vpop.f32.mrb[0].mxu0
      %v938 = vadd.f32 0.0, %v937
      %939 = vdwg.mxu0
      %940 = vmatprep.subr.mxu0 0.0
      %941 = vmatpush1.xpose.msra.mxu0 %v632
      %942 = vmatprep.subr.mxu0 0.0
      %943 = vmatpush1.xpose.msra.mxu0 %v635
      %944 = vmatprep.subr.mxu0 0.0
      %945 = vmatpush1.xpose.msra.mxu0 %v638
      %946 = vmatprep.subr.mxu0 0.0
      %947 = vmatpush1.xpose.msra.mxu0 %v641
      %948 = vmatprep.subr.mxu0 0.0
      %949 = vmatpush1.xpose.msra.mxu0 %v644
      %950 = vmatprep.subr.mxu0 0.0
      %951 = vmatpush1.xpose.msra.mxu0 %v647
      %952 = vmatprep.subr.mxu0 0.0
      %953 = vmatpush1.xpose.msra.mxu0 %v650
      %954 = vmatprep.subr.mxu0 0.0
      %955 = vmatpush1.xpose.msra.mxu0 %v653
      %956 = vmatprep.subr.mxu0 0.0
      %957 = vmatpush1.xpose.msra.mxu0 %v656
      %958 = vmatprep.subr.mxu0 0.0
      %959 = vmatpush1.xpose.msra.mxu0 %v659
      %960 = vmatprep.subr.mxu0 0.0
      %961 = vmatpush1.xpose.msra.mxu0 %v662
      %962 = vmatprep.subr.mxu0 0.0
      %963 = vmatpush1.xpose.msra.mxu0 %v665
      %964 = vmatprep.subr.mxu0 0.0
      %965 = vmatpush1.xpose.msra.mxu0 %v668
      %966 = vmatprep.subr.mxu0 0.0
      %967 = vmatpush1.xpose.msra.mxu0 %v671
      %968 = vmatprep.subr.mxu0 0.0
      %969 = vmatpush1.xpose.msra.mxu0 %v674
      %970 = vmatprep.subr.mxu0 0.0
      %971 = vmatpush1.xpose.msra.mxu0 %v677
      %972 = vmatprep.subr.mxu0 0.0
      %973 = vmatpush1.xpose.msra.mxu0 %v680
      %974 = vmatprep.subr.mxu0 0.0
      %975 = vmatpush1.xpose.msra.mxu0 %v683
      %976 = vmatprep.subr.mxu0 0.0
      %977 = vmatpush1.xpose.msra.mxu0 %v686
      %978 = vmatprep.subr.mxu0 0.0
      %979 = vmatpush1.xpose.msra.mxu0 %v689
      %980 = vmatprep.subr.mxu0 0.0
      %981 = vmatpush1.xpose.msra.mxu0 %v692
      %982 = vmatprep.subr.mxu0 0.0
      %983 = vmatpush1.xpose.msra.mxu0 %v695
      %984 = vmatprep.subr.mxu0 0.0
      %985 = vmatpush1.xpose.msra.mxu0 %v698
      %986 = vmatprep.subr.mxu0 0.0
      %987 = vmatpush1.xpose.msra.mxu0 %v701
      %988 = vmatprep.subr.mxu0 0.0
      %989 = vmatpush1.xpose.msra.mxu0 %v704
      %990 = vmatprep.subr.mxu0 0.0
      %991 = vmatpush1.xpose.msra.mxu0 %v707
      %992 = vmatprep.subr.mxu0 0.0
      %993 = vmatpush1.xpose.msra.mxu0 %v710
      %994 = vmatprep.subr.mxu0 0.0
      %995 = vmatpush1.xpose.msra.mxu0 %v713
      %996 = vmatprep.subr.mxu0 0.0
      %997 = vmatpush1.xpose.msra.mxu0 %v716
      %998 = vmatprep.subr.mxu0 0.0
      %999 = vmatpush1.xpose.msra.mxu0 %v719
      %1000 = vmatprep.subr.mxu0 0.0
      %1001 = vmatpush1.xpose.msra.mxu0 %v722
      %1002 = vmatprep.subr.mxu0 0.0
      %1003 = vmatpush1.xpose.msra.mxu0 %v725
      %1004 = vmatprep.mubr.f32.mxu0 0.0
      %1005 = vmatmul.mubr.f32.gmra.mrb[0].mxu0 %v341
      %v1006 = vpop.f32.mrb[0].mxu0
      %v1007 = vadd.f32 0.0, %v1006
      %v1008 = vpop.f32.mrb[0].mxu0
      %v1009 = vadd.f32 0.0, %v1008
      %1010 = vdwg.mxu0
      %1011 = vst [vmem:[%s208] sm:$0x1f] %v794
      %1012 = vst [vmem:[%s208 + $0x8] sm:$0x1f] %v796
      %1013 = vst [vmem:[%s208 + $0x10] sm:$0x1f] %v865
      %1014 = vst [vmem:[%s208 + $0x18] sm:$0x1f] %v867
      %1015 = vst [vmem:[%s208 + $0x20] sm:$0x1f] %v936
      %1016 = vst [vmem:[%s208 + $0x28] sm:$0x1f] %v938
      %1017 = vst [vmem:[%s208 + $0x30] sm:$0x1f] %v1007
      %1018 = vst [vmem:[%s208 + $0x38] sm:$0x1f] %v1009
      %s1019 = smul.u32 8, %s17
      %p1020 = scmp.lt.s32.totalorder %s18, 1
      %s1021 = scalar_select %p1020, %s18, 1
      %p1022 = scmp.lt.s32.totalorder %s1019, 7
      %s1023 = scalar_select %p1022, %s1019, 7
      %s1024 = smul.addr %s1021, 8
      %s1025 = sadd.s32 %s1023, %s1024
      %s1026 = smul.addr %s1025, 8
      %s1027 = scalar_lea.vmem %s2, %s1026
      // Predicated region
      $region29: #{tpu_custom_call.1} parent=27 // pred_check
        %p1028 = pneg %p99
      $region30: #{tpu_custom_call.1} parent=27 // pred_check_branch
        %1030 = sbr.rel (%p1028) target = $region32
      $region31: #{tpu_custom_call.1} parent=27 // pred_region
        %s1031 = smul.u32 8, %s17
      $region32: #{tpu_custom_call.1} parent=27 // pred_fallthru
        _
    $region28: #{tpu_custom_call.1} parent=5 // pred_fallthru
      _
    %p1032 = scmp.le.s32.totalorder 2, %s8
    // Predicated region
    $region33: #{tpu_custom_call.1} parent=5 // pred_check
      %p1033 = pneg %p1032
    $region34: #{tpu_custom_call.1} parent=5 // pred_check_branch
      %1035 = sbr.rel (%p1033) target = $region36
    $region35: #{tpu_custom_call.1} parent=5 // pred_region
      %s1036 = ssub.s32 %s8, 2
      // Predicated region
      $region37: #{tpu_custom_call.1} parent=35 // pred_check
        %p1037 = pneg %p105
      $region38: #{tpu_custom_call.1} parent=35 // pred_check_branch
        %1039 = sbr.rel (%p1037) target = $region40
      $region39: #{tpu_custom_call.1} parent=35 // pred_region
        %s1040 = smul.u32 8, %s19
        %p1041 = scmp.lt.s32.totalorder %s20, 1
        %s1042 = scalar_select %p1041, %s20, 1
        %p1043 = scmp.lt.s32.totalorder %s1040, 7
        %s1044 = scalar_select %p1043, %s1040, 7
        %s1045 = smul.addr %s1042, 8
        %s1046 = sadd.s32 %s1044, %s1045
        %s1047 = smul.addr %s1046, 8
        %s1048 = scalar_lea.vmem %s2, %s1047
      $region40: #{tpu_custom_call.1} parent=35 // pred_fallthru
        _
    $region36: #{tpu_custom_call.1} parent=5 // pred_fallthru
      _
  $region6: #{tpu_custom_call.1} parent=0 // loop_footer
    %s12 = sadd.s32 1, %s8
  $region7: #{tpu_custom_call.1} parent=0 // loop_footer_branch
    %7 = sbr.rel target = $region3
  $region8: #{tpu_custom_call.1} parent=0 // loop_exit
    _

</llo_original>
